<compile_context>
chip_gen: v7x
topology: tpu7x:2x2x1
jax: 0.10.0
libtpu: 0.0.40
codegen_flags: <defaults>
</compile_context>

<pallas_src>
import functools

import jax
import jax.numpy as jnp
from jax.experimental import pallas as pl
from jax.experimental.pallas import tpu as pltpu


def _round_up(x, m):
    return (x + m - 1) // m * m


def _conv_silu_kernel(x_ref, w_ref, b_ref, o_ref, z_ref, *,
                      H, W, KH, KW, pad_l):
    """Fused 3x3 conv (stride 1, pad 1) + bias + SiLU over all images at once.

    x_ref: (Rin_p, H*W)            input planes (n, ci), flattened row-major (VMEM)
    w_ref: (KH*KW, Rout_p, Rin_p)  per-tap block-diagonal weights (VMEM)
    b_ref: (Rout_p, 1)             per-output-row bias column (VMEM)
    o_ref: (Rout_p, H*W)           output planes (n, co), lane-dense (VMEM)
    z_ref: (Rin_p, SLAB)           padded scratch slab (VMEM)
    """
    f32 = jnp.float32
    HW = H * W
    rin = z_ref.shape[0]
    slab = z_ref.shape[1]

    # In-kernel zero padding: only the border lane regions are zeroed (the
    # interior is fully overwritten by x).  pad_l and HW are lane-aligned, so
    # all three stores are unmasked, aligned stores.
    z_ref[:, :pad_l] = jnp.zeros((rin, pad_l), f32)
    z_ref[:, pad_l + HW:slab] = jnp.zeros((rin, slab - pad_l - HW), f32)
    z_ref[:, pad_l:pad_l + HW] = x_ref[...].astype(f32)

    # Lane masks killing horizontal wrap-around reads of the flattened layout.
    col = jax.lax.broadcasted_iota(jnp.int32, (1, HW), 1) % W
    not_left = (col != 0).astype(f32)        # for dw = -1 taps
    not_right = (col != W - 1).astype(f32)   # for dw = +1 taps

    acc = jnp.zeros((o_ref.shape[0], HW), f32)
    for kh in range(KH):
        dh = kh - KH // 2
        for kw in range(KW):
            dw = kw - KW // 2
            k = kh * KW + kw
            start = pad_l + dh * W + dw
            tap = z_ref[:, start:start + HW]          # (Rin_p, HW), all rows at once
            if dw < 0:
                tap = tap * not_left
            elif dw > 0:
                tap = tap * not_right
            # Block-diagonal (Rout_p, Rin_p) x (Rin_p, HW) contraction on the MXU.
            acc = acc + jnp.dot(w_ref[k], tap, preferred_element_type=f32)

    v1 = acc + b_ref[...]                              # bias broadcast along lanes
    o_ref[...] = (v1 * jax.nn.sigmoid(v1)).astype(o_ref.dtype)


@jax.jit
def conv2d_silu(x_nchw, w_oihw, bias):
    """x_nchw: (N, Cin, H, W); w_oihw: (Cout, Cin, KH, KW) PyTorch OIHW; bias: (Cout,)."""
    N, Cin, H, W = x_nchw.shape
    Cout, _, KH, KW = w_oihw.shape
    HW = H * W

    r_in, r_out = N * Cin, N * Cout
    r_in_p, r_out_p = _round_up(r_in, 8), _round_up(r_out, 8)

    pad_l = _round_up(W + 1, 128)                  # lane-aligned left pad of the slab
    slab = _round_up(pad_l + HW + W + 1, 128)      # total padded slab width

    # Input planes flattened row-major; pad (n, ci) rows to a sublane multiple.
    x2 = jnp.pad(x_nchw.reshape(r_in, HW), ((0, r_in_p - r_in), (0, 0)))

    # Per-tap block-diagonal weights: w_bd[k, n*Cout+co, n*Cin+ci] = w[co, ci, kh, kw].
    w_k = jnp.transpose(w_oihw, (2, 3, 0, 1)).reshape(KH * KW, Cout, Cin)
    eye = jnp.eye(N, dtype=w_oihw.dtype)
    w_bd = jnp.einsum('nm,koi->knomi', eye, w_k).reshape(KH * KW, r_out, r_in)
    w_bd = jnp.pad(w_bd, ((0, 0), (0, r_out_p - r_out), (0, r_in_p - r_in)))

    # Bias column: row n*Cout+co gets bias[co]; padded rows get 0.
    b2 = jnp.pad(jnp.tile(bias, (N,)).reshape(r_out, 1),
                 ((0, r_out_p - r_out), (0, 0)))

    kernel = functools.partial(_conv_silu_kernel, H=H, W=W, KH=KH, KW=KW,
                               pad_l=pad_l)

    out2 = pl.pallas_call(
        kernel,
        out_shape=jax.ShapeDtypeStruct((r_out_p, HW), x_nchw.dtype),
        in_specs=[
            pl.BlockSpec(memory_space=pltpu.MemorySpace.VMEM),   # input planes
            pl.BlockSpec(memory_space=pltpu.MemorySpace.VMEM),   # block-diag weights
            pl.BlockSpec(memory_space=pltpu.MemorySpace.VMEM),   # bias column
        ],
        out_specs=pl.BlockSpec(memory_space=pltpu.MemorySpace.VMEM),
        scratch_shapes=[pltpu.VMEM((r_in_p, slab), jnp.float32)],
        cost_estimate=pl.CostEstimate(
            flops=2 * N * HW * KH * KW * Cin * Cout,
            transcendentals=2 * N * Cout * HW,                 # exp + reciprocal
            bytes_accessed=4 * (r_in_p * HW + KH * KW * r_out_p * r_in_p
                                + r_out_p + r_out_p * HW)),
    )(x2, w_bd, b2)

    return out2[:r_out].reshape(N, Cout, H, W)


if __name__ == "__main__":
    key = jax.random.PRNGKey(0)
    kx, kw, kb = jax.random.split(key, 3)

    # Shapes implied by Conv2d(3, 3, 3, stride=1, padding=1).
    N, Cin, H, W = 2, 3, 16, 16
    Cout, KH, KW = 3, 3, 3

    x = jax.random.normal(kx, (N, Cin, H, W), dtype=jnp.float32)

    # PyTorch-style uniform init, bound = 1/sqrt(fan_in); weights in OIHW.
    fan_in = Cin * KH * KW
    bound = 1.0 / (fan_in ** 0.5)
    w = jax.random.uniform(kw, (Cout, Cin, KH, KW), jnp.float32, -bound, bound)
    b = jax.random.uniform(kb, (Cout,), jnp.float32, -bound, bound)

    out = conv2d_silu(x, w, b)
    jax.block_until_ready(out)

    # Cross-check against plain-JAX reference conv + SiLU.
    ref_v1 = jax.lax.conv_general_dilated(
        x, w, window_strides=(1, 1), padding="SAME",
        dimension_numbers=("NCHW", "OIHW", "NCHW")) + b.reshape(1, Cout, 1, 1)
    ref = ref_v1 * jax.nn.sigmoid(ref_v1)
    assert out.shape == (N, Cout, H, W)
    assert jnp.allclose(out, ref, atol=1e-5, rtol=1e-5)

    print("KERNEL_OK")
</pallas_src>

<mosaic_0001>
module attributes {stable_mosaic.version = 11 : i64} {
  func.func @_conv_silu_kernel(%arg0: memref<8x256xf32, #tpu.memory_space<vmem>>, %arg1: memref<9x8x8xf32, #tpu.memory_space<vmem>>, %arg2: memref<8x1xf32, #tpu.memory_space<vmem>>, %arg3: memref<8x256xf32, #tpu.memory_space<vmem>>, %arg4: memref<8x512xf32, #tpu.memory_space<vmem>>) attributes {dimension_semantics = [], scalar_prefetch = 0 : i64, scratch_operands = 1 : i64, tpu.core_type = #tpu.core_type<tc>} {
    %cst = arith.constant 0.000000e+00 : f32
    %0 = vector.broadcast %cst : f32 to vector<8x128xf32>
    %c0 = arith.constant 0 : index
    %c0_0 = arith.constant 0 : index
    %1 = vector.load %arg4[%c0, %c0_0] : memref<8x512xf32, #tpu.memory_space<vmem>>, vector<8x128xf32>
    tpu.vector_store %arg4[%c0, %c0_0], %0 {strides = array<i32>} : memref<8x512xf32, #tpu.memory_space<vmem>>, vector<8x128xf32>,
    %cst_1 = arith.constant 0.000000e+00 : f32
    %2 = vector.broadcast %cst_1 : f32 to vector<8x128xf32>
    %c0_2 = arith.constant 0 : index
    %c384 = arith.constant 384 : index
    %3 = vector.load %arg4[%c0_2, %c384] : memref<8x512xf32, #tpu.memory_space<vmem>>, vector<8x128xf32>
    tpu.vector_store %arg4[%c0_2, %c384], %2 {strides = array<i32>} : memref<8x512xf32, #tpu.memory_space<vmem>>, vector<8x128xf32>,
    %c0_3 = arith.constant 0 : index
    %c0_4 = arith.constant 0 : index
    %4 = vector.load %arg0[%c0_3, %c0_4] : memref<8x256xf32, #tpu.memory_space<vmem>>, vector<8x256xf32>
    %c0_5 = arith.constant 0 : index
    %c128 = arith.constant 128 : index
    %5 = vector.load %arg4[%c0_5, %c128] : memref<8x512xf32, #tpu.memory_space<vmem>>, vector<8x256xf32>
    tpu.vector_store %arg4[%c0_5, %c128], %4 {strides = array<i32>} : memref<8x512xf32, #tpu.memory_space<vmem>>, vector<8x256xf32>,
    %6 = tpu.iota {dimensions = array<i32: 1>} : vector<1x256xi32>
    %c16_i32 = arith.constant 16 : i32
    %c0_i32 = arith.constant 0 : i32
    %7 = arith.cmpi eq, %c16_i32, %c0_i32 : i32
    %c1_i32 = arith.constant 1 : i32
    %8 = arith.select %7, %c1_i32, %c16_i32 : i32
    %9 = vector.broadcast %8 : i32 to vector<1x256xi32>
    %10 = arith.remsi %6, %9 : vector<1x256xi32>
    %c0_i32_6 = arith.constant 0 : i32
    %11 = vector.broadcast %c0_i32_6 : i32 to vector<1x256xi32>
    %12 = arith.cmpi ne, %10, %11 : vector<1x256xi32>
    %c0_i32_7 = arith.constant 0 : i32
    %13 = vector.broadcast %c0_i32_7 : i32 to vector<1x256xi32>
    %14 = arith.cmpi slt, %10, %13 : vector<1x256xi32>
    %c0_i32_8 = arith.constant 0 : i32
    %15 = arith.cmpi slt, %8, %c0_i32_8 : i32
    %16 = vector.broadcast %15 : i1 to vector<1x256xi1>
    %17 = vector.broadcast %16 : vector<1x256xi1> to vector<1x256xi1>
    %18 = arith.xori %14, %17 : vector<1x256xi1>
    %19 = arith.andi %18, %12 : vector<1x256xi1>
    %20 = vector.broadcast %8 : i32 to vector<1x256xi32>
    %21 = arith.addi %10, %20 : vector<1x256xi32>
    %22 = arith.select %19, %21, %10 : vector<1x256xi1>, vector<1x256xi32>
    %c0_i32_9 = arith.constant 0 : i32
    %23 = vector.broadcast %c0_i32_9 : i32 to vector<1x256xi32>
    %24 = arith.cmpi ne, %22, %23 : vector<1x256xi32>
    %25 = arith.extui %24 : vector<1x256xi1> to vector<1x256xi32>
    %26 = arith.sitofp %25 : vector<1x256xi32> to vector<1x256xf32>
    %c15_i32 = arith.constant 15 : i32
    %27 = vector.broadcast %c15_i32 : i32 to vector<1x256xi32>
    %28 = arith.cmpi ne, %22, %27 : vector<1x256xi32>
    %29 = arith.extui %28 : vector<1x256xi1> to vector<1x256xi32>
    %30 = arith.sitofp %29 : vector<1x256xi32> to vector<1x256xf32>
    %cst_10 = arith.constant 0.000000e+00 : f32
    %31 = vector.broadcast %cst_10 : f32 to vector<8x256xf32>
    %c0_11 = arith.constant 0 : index
    %c111 = arith.constant 111 : index
    %32 = vector.load %arg4[%c0_11, %c111] : memref<8x512xf32, #tpu.memory_space<vmem>>, vector<8x256xf32>
    %33 = vector.broadcast %26 : vector<1x256xf32> to vector<8x256xf32>
    %34 = arith.mulf %32, %33 : vector<8x256xf32>
    %c0_12 = arith.constant 0 : index
    %c0_13 = arith.constant 0 : index
    %c0_14 = arith.constant 0 : index
    %35 = vector.load %arg1[%c0_12, %c0_13, %c0_14] : memref<9x8x8xf32, #tpu.memory_space<vmem>>, vector<1x8x8xf32>
    %36 = vector.shape_cast %35 : vector<1x8x8xf32> to vector<8x8xf32>
    %cst_15 = arith.constant dense<0.000000e+00> : vector<8x256xf32>
    %37 = tpu.matmul %36, %34, %cst_15 {dimension_numbers = #tpu.dot_dimension_numbers<[1], [0], [0], [1], [0, 0, 1, 1], [], []>} : vector<8x8xf32>, vector<8x256xf32>, vector<8x256xf32> -> vector<8x256xf32>
    %38 = arith.addf %31, %37 : vector<8x256xf32>
    %c0_16 = arith.constant 0 : index
    %c112 = arith.constant 112 : index
    %39 = vector.load %arg4[%c0_16, %c112] : memref<8x512xf32, #tpu.memory_space<vmem>>, vector<8x256xf32>
    %c1 = arith.constant 1 : index
    %c0_17 = arith.constant 0 : index
    %c0_18 = arith.constant 0 : index
    %40 = vector.load %arg1[%c1, %c0_17, %c0_18] : memref<9x8x8xf32, #tpu.memory_space<vmem>>, vector<1x8x8xf32>
    %41 = vector.shape_cast %40 : vector<1x8x8xf32> to vector<8x8xf32>
    %cst_19 = arith.constant dense<0.000000e+00> : vector<8x256xf32>
    %42 = tpu.matmul %41, %39, %cst_19 {dimension_numbers = #tpu.dot_dimension_numbers<[1], [0], [0], [1], [0, 0, 1, 1], [], []>} : vector<8x8xf32>, vector<8x256xf32>, vector<8x256xf32> -> vector<8x256xf32>
    %43 = arith.addf %38, %42 : vector<8x256xf32>
    %c0_20 = arith.constant 0 : index
    %c113 = arith.constant 113 : index
    %44 = vector.load %arg4[%c0_20, %c113] : memref<8x512xf32, #tpu.memory_space<vmem>>, vector<8x256xf32>
    %45 = vector.broadcast %30 : vector<1x256xf32> to vector<8x256xf32>
    %46 = arith.mulf %44, %45 : vector<8x256xf32>
    %c2 = arith.constant 2 : index
    %c0_21 = arith.constant 0 : index
    %c0_22 = arith.constant 0 : index
    %47 = vector.load %arg1[%c2, %c0_21, %c0_22] : memref<9x8x8xf32, #tpu.memory_space<vmem>>, vector<1x8x8xf32>
    %48 = vector.shape_cast %47 : vector<1x8x8xf32> to vector<8x8xf32>
    %cst_23 = arith.constant dense<0.000000e+00> : vector<8x256xf32>
    %49 = tpu.matmul %48, %46, %cst_23 {dimension_numbers = #tpu.dot_dimension_numbers<[1], [0], [0], [1], [0, 0, 1, 1], [], []>} : vector<8x8xf32>, vector<8x256xf32>, vector<8x256xf32> -> vector<8x256xf32>
    %50 = arith.addf %43, %49 : vector<8x256xf32>
    %c0_24 = arith.constant 0 : index
    %c127 = arith.constant 127 : index
    %51 = vector.load %arg4[%c0_24, %c127] : memref<8x512xf32, #tpu.memory_space<vmem>>, vector<8x256xf32>
    %52 = vector.broadcast %26 : vector<1x256xf32> to vector<8x256xf32>
    %53 = arith.mulf %51, %52 : vector<8x256xf32>
    %c3 = arith.constant 3 : index
    %c0_25 = arith.constant 0 : index
    %c0_26 = arith.constant 0 : index
    %54 = vector.load %arg1[%c3, %c0_25, %c0_26] : memref<9x8x8xf32, #tpu.memory_space<vmem>>, vector<1x8x8xf32>
    %55 = vector.shape_cast %54 : vector<1x8x8xf32> to vector<8x8xf32>
    %cst_27 = arith.constant dense<0.000000e+00> : vector<8x256xf32>
    %56 = tpu.matmul %55, %53, %cst_27 {dimension_numbers = #tpu.dot_dimension_numbers<[1], [0], [0], [1], [0, 0, 1, 1], [], []>} : vector<8x8xf32>, vector<8x256xf32>, vector<8x256xf32> -> vector<8x256xf32>
    %57 = arith.addf %50, %56 : vector<8x256xf32>
    %c0_28 = arith.constant 0 : index
    %c128_29 = arith.constant 128 : index
    %58 = vector.load %arg4[%c0_28, %c128_29] : memref<8x512xf32, #tpu.memory_space<vmem>>, vector<8x256xf32>
    %c4 = arith.constant 4 : index
    %c0_30 = arith.constant 0 : index
    %c0_31 = arith.constant 0 : index
    %59 = vector.load %arg1[%c4, %c0_30, %c0_31] : memref<9x8x8xf32, #tpu.memory_space<vmem>>, vector<1x8x8xf32>
    %60 = vector.shape_cast %59 : vector<1x8x8xf32> to vector<8x8xf32>
    %cst_32 = arith.constant dense<0.000000e+00> : vector<8x256xf32>
    %61 = tpu.matmul %60, %58, %cst_32 {dimension_numbers = #tpu.dot_dimension_numbers<[1], [0], [0], [1], [0, 0, 1, 1], [], []>} : vector<8x8xf32>, vector<8x256xf32>, vector<8x256xf32> -> vector<8x256xf32>
    %62 = arith.addf %57, %61 : vector<8x256xf32>
    %c0_33 = arith.constant 0 : index
    %c129 = arith.constant 129 : index
    %63 = vector.load %arg4[%c0_33, %c129] : memref<8x512xf32, #tpu.memory_space<vmem>>, vector<8x256xf32>
    %64 = vector.broadcast %30 : vector<1x256xf32> to vector<8x256xf32>
    %65 = arith.mulf %63, %64 : vector<8x256xf32>
    %c5 = arith.constant 5 : index
    %c0_34 = arith.constant 0 : index
    %c0_35 = arith.constant 0 : index
    %66 = vector.load %arg1[%c5, %c0_34, %c0_35] : memref<9x8x8xf32, #tpu.memory_space<vmem>>, vector<1x8x8xf32>
    %67 = vector.shape_cast %66 : vector<1x8x8xf32> to vector<8x8xf32>
    %cst_36 = arith.constant dense<0.000000e+00> : vector<8x256xf32>
    %68 = tpu.matmul %67, %65, %cst_36 {dimension_numbers = #tpu.dot_dimension_numbers<[1], [0], [0], [1], [0, 0, 1, 1], [], []>} : vector<8x8xf32>, vector<8x256xf32>, vector<8x256xf32> -> vector<8x256xf32>
    %69 = arith.addf %62, %68 : vector<8x256xf32>
    %c0_37 = arith.constant 0 : index
    %c143 = arith.constant 143 : index
    %70 = vector.load %arg4[%c0_37, %c143] : memref<8x512xf32, #tpu.memory_space<vmem>>, vector<8x256xf32>
    %71 = vector.broadcast %26 : vector<1x256xf32> to vector<8x256xf32>
    %72 = arith.mulf %70, %71 : vector<8x256xf32>
    %c6 = arith.constant 6 : index
    %c0_38 = arith.constant 0 : index
    %c0_39 = arith.constant 0 : index
    %73 = vector.load %arg1[%c6, %c0_38, %c0_39] : memref<9x8x8xf32, #tpu.memory_space<vmem>>, vector<1x8x8xf32>
    %74 = vector.shape_cast %73 : vector<1x8x8xf32> to vector<8x8xf32>
    %cst_40 = arith.constant dense<0.000000e+00> : vector<8x256xf32>
    %75 = tpu.matmul %74, %72, %cst_40 {dimension_numbers = #tpu.dot_dimension_numbers<[1], [0], [0], [1], [0, 0, 1, 1], [], []>} : vector<8x8xf32>, vector<8x256xf32>, vector<8x256xf32> -> vector<8x256xf32>
    %76 = arith.addf %69, %75 : vector<8x256xf32>
    %c0_41 = arith.constant 0 : index
    %c144 = arith.constant 144 : index
    %77 = vector.load %arg4[%c0_41, %c144] : memref<8x512xf32, #tpu.memory_space<vmem>>, vector<8x256xf32>
    %c7 = arith.constant 7 : index
    %c0_42 = arith.constant 0 : index
    %c0_43 = arith.constant 0 : index
    %78 = vector.load %arg1[%c7, %c0_42, %c0_43] : memref<9x8x8xf32, #tpu.memory_space<vmem>>, vector<1x8x8xf32>
    %79 = vector.shape_cast %78 : vector<1x8x8xf32> to vector<8x8xf32>
    %cst_44 = arith.constant dense<0.000000e+00> : vector<8x256xf32>
    %80 = tpu.matmul %79, %77, %cst_44 {dimension_numbers = #tpu.dot_dimension_numbers<[1], [0], [0], [1], [0, 0, 1, 1], [], []>} : vector<8x8xf32>, vector<8x256xf32>, vector<8x256xf32> -> vector<8x256xf32>
    %81 = arith.addf %76, %80 : vector<8x256xf32>
    %c0_45 = arith.constant 0 : index
    %c145 = arith.constant 145 : index
    %82 = vector.load %arg4[%c0_45, %c145] : memref<8x512xf32, #tpu.memory_space<vmem>>, vector<8x256xf32>
    %83 = vector.broadcast %30 : vector<1x256xf32> to vector<8x256xf32>
    %84 = arith.mulf %82, %83 : vector<8x256xf32>
    %c8 = arith.constant 8 : index
    %c0_46 = arith.constant 0 : index
    %c0_47 = arith.constant 0 : index
    %85 = vector.load %arg1[%c8, %c0_46, %c0_47] : memref<9x8x8xf32, #tpu.memory_space<vmem>>, vector<1x8x8xf32>
    %86 = vector.shape_cast %85 : vector<1x8x8xf32> to vector<8x8xf32>
    %cst_48 = arith.constant dense<0.000000e+00> : vector<8x256xf32>
    %87 = tpu.matmul %86, %84, %cst_48 {dimension_numbers = #tpu.dot_dimension_numbers<[1], [0], [0], [1], [0, 0, 1, 1], [], []>} : vector<8x8xf32>, vector<8x256xf32>, vector<8x256xf32> -> vector<8x256xf32>
    %88 = arith.addf %81, %87 : vector<8x256xf32>
    %c0_49 = arith.constant 0 : index
    %c0_50 = arith.constant 0 : index
    %89 = vector.load %arg2[%c0_49, %c0_50] : memref<8x1xf32, #tpu.memory_space<vmem>>, vector<8x1xf32>
    %90 = vector.broadcast %89 : vector<8x1xf32> to vector<8x256xf32>
    %91 = arith.addf %88, %90 : vector<8x256xf32>
    %92 = arith.negf %91 : vector<8x256xf32>
    %93 = math.exp %92 : vector<8x256xf32>
    %cst_51 = arith.constant 1.000000e+00 : f32
    %94 = vector.broadcast %cst_51 : f32 to vector<8x256xf32>
    %95 = arith.addf %94, %93 : vector<8x256xf32>
    %96 = arith.divf %94, %95 : vector<8x256xf32>
    %97 = arith.mulf %91, %96 : vector<8x256xf32>
    %c0_52 = arith.constant 0 : index
    %c0_53 = arith.constant 0 : index
    %98 = vector.load %arg3[%c0_52, %c0_53] : memref<8x256xf32, #tpu.memory_space<vmem>>, vector<8x256xf32>
    tpu.vector_store %arg3[%c0_52, %c0_53], %97 {strides = array<i32>} : memref<8x256xf32, #tpu.memory_space<vmem>>, vector<8x256xf32>,
    return
  }
}

</mosaic_0001>

<llo_original>
// kernel: tile.8
$region0: #{tile.8}
  #allocation0 [shape = 's32[1]{0}', space=sflag, size = 0x4, scoped, tag = 'scoped memory for tile.8']
  %s0 = inlined_call_operand.vmem [shape: f32[3], index: 0, kind: input, shape index: {}]
  %s1 = inlined_call_operand.vmem [shape: f32[2,3], index: 1, kind: output, shape index: {}]
  // Predicated region
  $region2: #{tile.8} parent=0 // pred_check
    _
  $region3: #{tile.8} parent=0 // pred_check_branch
    %3 = sbr.rel (0) target = $region5
  $region4: #{tile.8} parent=0 // pred_region
    _
  $region5: #{tile.8} parent=0 // pred_fallthru
    _
  %v4 = vld [vmem:[%s0] ss:$0 sm:$0xff]
  %5 = vst [vmem:[%s1] sm:$0x3] %v4

// kernel: tile.0
$region0: #{tile.0}
  %s0 = inlined_call_operand.vmem [shape: f32[2,3], index: 0, kind: input, shape index: {}]
  %s1 = inlined_call_operand.vmem [shape: f32[6,1], index: 1, kind: output, shape index: {}]
  $region1: #{tile.0} parent=0
    #allocation0 [shape = 'u8[4096]{0}', space=vmem, size = 0x1000, scoped, tag = 'scoped mem for input reshape']
    %s3 = sshllo.u32 0, 2
    %v4 = vld [vmem:[%s0] sm:%s3]
    %5 = vst [vmem:[#allocation0] sm:%s3] %v4
    %v6 = vld [vmem:[#allocation0] sm:$0x3]
    %vm7 = vcmask 7168
    %8 = vst.msk [vmem:[%s1] ss:$3 sm:$0x3] %vm7, %v6
    %v9 = vld [vmem:[#allocation0] sm:$0x3]
    %10 = vrot.lane.b32.xlu0 %v9, 127
    %v11 = vpop.permute.xlu0 %10
    %vm12 = vcmask 7168
    %s13 = scalar_lea.vmem %s1, 1
    %14 = vst.msk [vmem:[%s13] ss:$3 sm:$0x3] %vm12, %v11
    %v15 = vld [vmem:[#allocation0] sm:$0x3]
    %16 = vrot.lane.b32.xlu0 %v15, 126
    %v17 = vpop.permute.xlu0 %16
    %vm18 = vcmask 7168
    %s19 = scalar_lea.vmem %s1, 2
    %20 = vst.msk [vmem:[%s19] ss:$3 sm:$0x3] %vm18, %v17

// kernel: conv2d_silu.1
$region0: #{conv2d_silu.1}
  #allocation0 [shape = 'u32[]', space=smem, size = 0x4, offset = 0x4, fixed_abs, tag = 'smem constant byte address 0x4 - core index']
  #allocation1 [shape = 'u32[144,128]{1,0:T(1,128)}', space=vmem, size = 0x12000, scoped, tag = 'internal scratch']
  #allocation2 [shape = 'f32[8,512]{1,0:T(8,128)}', space=vmem, size = 0x4000, scoped, tag = 'scratch operand']
  %s0 = inlined_call_operand.vmem [shape: f32[8,256], index: 0, kind: input, shape index: {}]
  %s1 = inlined_call_operand.vmem [shape: f32[9,8,8], index: 1, kind: input, shape index: {}]
  %s2 = inlined_call_operand.vmem [shape: f32[8,1], index: 2, kind: input, shape index: {}]
  %s3 = inlined_call_operand.vmem [shape: f32[8,256], index: 3, kind: output, shape index: {}]
  %s4 = sld [smem:[#allocation0]]
  $region22: #{conv2d_silu.1} parent=0
    _
  %s6 = ssub.s32 1, %s4
  %s7 = scalar_select 0, %s6, %s4
  // Predicated region
  $region2: #{conv2d_silu.1} parent=0 // pred_check
    _
  $region3: #{conv2d_silu.1} parent=0 // pred_check_branch
    %9 = sbr.rel (0) target = $region5
  $region4: #{conv2d_silu.1} parent=0 // pred_region
    _
  $region5: #{conv2d_silu.1} parent=0 // pred_fallthru
    _
  // Predicated region
  $region6: #{conv2d_silu.1} parent=0 // pred_check
    _
  $region7: #{conv2d_silu.1} parent=0 // pred_check_branch
    %11 = sbr.rel (0) target = $region9
  $region8: #{conv2d_silu.1} parent=0 // pred_region
    _
  $region9: #{conv2d_silu.1} parent=0 // pred_fallthru
    _
  // Predicated region
  $region10: #{conv2d_silu.1} parent=0 // pred_check
    _
  $region11: #{conv2d_silu.1} parent=0 // pred_check_branch
    %13 = sbr.rel (0) target = $region13
  $region12: #{conv2d_silu.1} parent=0 // pred_region
    _
  $region13: #{conv2d_silu.1} parent=0 // pred_fallthru
    _
  %14 = vst [vmem:[#allocation2] sm:$0xff] 0.0
  %15 = vst [vmem:[#allocation2 + $0x18] sm:$0xff] 0.0
  %v16 = vld [vmem:[%s0] sm:$0xff]
  %v17 = vld [vmem:[%s0 + $0x8] sm:$0xff]
  %18 = vst [vmem:[#allocation2 + $0x8] sm:$0xff] %v16
  %19 = vst [vmem:[#allocation2 + $0x10] sm:$0xff] %v17
  %v20 = vlaneseq
  %v21 = vand.u32 %v20, 127
  %v22 = vadd.s32 %v21, 128
  %vm23 = vcmp.lt.s32.totalorder %v21, 0
  %v24 = vsub.s32 0, %v21
  %v25 = vsel %vm23, %v24, %v21
  %v26 = vshrl.u32 %v25, 4
  %v27 = vand.u32 %v25, 15
  %v28 = vsub.s32 0, %v27
  %v29 = vsel %vm23, %v28, %v27
  %vm30 = vcmp.lt.s32.totalorder %v22, 0
  %v31 = vsub.s32 0, %v22
  %v32 = vsel %vm30, %v31, %v22
  %v33 = vshrl.u32 %v32, 4
  %v34 = vand.u32 %v32, 15
  %v35 = vsub.s32 0, %v34
  %v36 = vsel %vm30, %v35, %v34
  %vm37 = vcmp.ne.s32.totalorder %v29, 0
  %vm38 = vcmp.ne.s32.totalorder %v36, 0
  %vm39 = vcmp.lt.s32.totalorder %v29, 0
  %vm40 = vcmp.lt.s32.totalorder %v36, 0
  %vm41 = vmand %vm39, %vm37
  %vm42 = vmand %vm40, %vm38
  %v43 = vadd.s32 %v29, 16
  %v44 = vadd.s32 %v36, 16
  %v45 = vsel %vm41, %v43, %v29
  %v46 = vsel %vm42, %v44, %v36
  %vm47 = vcmp.ne.s32.totalorder %v45, 0
  %vm48 = vcmp.ne.s32.totalorder %v46, 0
  %v49 = vsel %vm47, 1, 0
  %v50 = vsel %vm48, 1, 0
  %v51 = vcvt.s32.f32 %v49
  %v52 = vcvt.s32.f32 %v50
  %vm53 = vcmp.ne.s32.totalorder %v45, 15
  %vm54 = vcmp.ne.s32.totalorder %v46, 15
  %v55 = vsel %vm53, 1, 0
  %v56 = vsel %vm54, 1, 0
  %v57 = vcvt.s32.f32 %v55
  %v58 = vcvt.s32.f32 %v56
  %v59 = vld [vmem:[#allocation2] sm:$0xff]
  %v60 = vld [vmem:[#allocation2 + $0x8] sm:$0xff]
  %v61 = vld [vmem:[#allocation2 + $0x10] sm:$0xff]
  %64 = vrot.lane.b32.xlu0 %v51, 111
  %v65 = vpop.permute.xlu0 %64
  %66 = vrot.lane.b32.xlu0 %v52, 111
  %v67 = vpop.permute.xlu0 %66
  %vm68 = vcmask 908288
  %v69 = vsel %vm68, %v65, %v67
  %v73 = vmul.f32 %v59, %v65
  %v74 = vmul.f32 %v60, %v69
  %v75 = vmul.f32 %v61, %v67
  %v76 = vld [vmem:[%s1] sm:$0xff]
  %s77 = scalar_lea.vmem %s1, 8
  %v78 = vld [vmem:[%s77] sm:$0xff]
  %82 = vrot.lane.b32.xlu0 %v59, 16
  %v83 = vpop.permute.xlu0 %82
  %84 = vrot.lane.b32.xlu0 %v60, 16
  %v85 = vpop.permute.xlu0 %84
  %86 = vrot.lane.b32.xlu0 %v61, 16
  %v87 = vpop.permute.xlu0 %86
  %vm88 = vcmask 130048
  %v89 = vsel %vm88, %v83, %v85
  %v90 = vsel %vm88, %v85, %v87
  %vm93 = vcmask 64512
  %v95 = vsel %vm93, %v78, 0
  %97 = vmatprep.subr.mxu0 %v90
  %98 = vmatpush1.msra.mxu0 %v89
  %99 = vmatprep.subr.mxu0 0.0
  %100 = vmatpush1.msra.mxu0 0.0
  %101 = vmatprep.subr.mxu0 0.0
  %102 = vmatpush1.msra.mxu0 0.0
  %103 = vmatprep.subr.mxu0 0.0
  %104 = vmatpush1.msra.mxu0 0.0
  %105 = vmatprep.subr.mxu0 0.0
  %106 = vmatpush1.msra.mxu0 0.0
  %107 = vmatprep.subr.mxu0 0.0
  %108 = vmatpush1.msra.mxu0 0.0
  %109 = vmatprep.subr.mxu0 0.0
  %110 = vmatpush1.msra.mxu0 0.0
  %111 = vmatprep.subr.mxu0 0.0
  %112 = vmatpush1.msra.mxu0 0.0
  %113 = vmatprep.subr.mxu0 0.0
  %114 = vmatpush1.msra.mxu0 0.0
  %115 = vmatprep.subr.mxu0 0.0
  %116 = vmatpush1.msra.mxu0 0.0
  %117 = vmatprep.subr.mxu0 0.0
  %118 = vmatpush1.msra.mxu0 0.0
  %119 = vmatprep.subr.mxu0 0.0
  %120 = vmatpush1.msra.mxu0 0.0
  %121 = vmatprep.subr.mxu0 0.0
  %122 = vmatpush1.msra.mxu0 0.0
  %123 = vmatprep.subr.mxu0 0.0
  %124 = vmatpush1.msra.mxu0 0.0
  %125 = vmatprep.subr.mxu0 0.0
  %126 = vmatpush1.msra.mxu0 0.0
  %127 = vmatprep.subr.mxu0 0.0
  %128 = vmatpush1.msra.mxu0 0.0
  %129 = vmatprep.subr.mxu0 0.0
  %130 = vmatpush1.msra.mxu0 0.0
  %131 = vmatprep.subr.mxu0 0.0
  %132 = vmatpush1.msra.mxu0 0.0
  %133 = vmatprep.subr.mxu0 0.0
  %134 = vmatpush1.msra.mxu0 0.0
  %135 = vmatprep.subr.mxu0 0.0
  %136 = vmatpush1.msra.mxu0 0.0
  %137 = vmatprep.subr.mxu0 0.0
  %138 = vmatpush1.msra.mxu0 0.0
  %139 = vmatprep.subr.mxu0 0.0
  %140 = vmatpush1.msra.mxu0 0.0
  %141 = vmatprep.subr.mxu0 0.0
  %142 = vmatpush1.msra.mxu0 0.0
  %143 = vmatprep.subr.mxu0 0.0
  %144 = vmatpush1.msra.mxu0 0.0
  %145 = vmatprep.subr.mxu0 0.0
  %146 = vmatpush1.msra.mxu0 0.0
  %147 = vmatprep.subr.mxu0 0.0
  %148 = vmatpush1.msra.mxu0 0.0
  %149 = vmatprep.subr.mxu0 0.0
  %150 = vmatpush1.msra.mxu0 0.0
  %151 = vmatprep.subr.mxu0 0.0
  %152 = vmatpush1.msra.mxu0 0.0
  %153 = vmatprep.subr.mxu0 0.0
  %154 = vmatpush1.msra.mxu0 0.0
  %155 = vmatprep.subr.mxu0 0.0
  %156 = vmatpush1.msra.mxu0 0.0
  %157 = vmatprep.subr.mxu0 0.0
  %158 = vmatpush1.msra.mxu0 0.0
  %159 = vmatprep.subr.mxu0 0.0
  %160 = vmatpush1.msra.mxu0 0.0
  %161 = vmatprep.mubr.f32.mxu0 0.0
  %162 = vmatmul.mubr.f32.gmra.mrb[0].mxu0 %v95
  %v163 = vpop.f32.mrb[0].mxu0
  %v164 = vadd.f32 0.0, %v163
  %v165 = vpop.f32.mrb[0].mxu0
  %v166 = vadd.f32 0.0, %v165
  %167 = vdwg.mxu0
  %171 = vrot.lane.b32.xlu0 %v73, 17
  %v172 = vpop.permute.xlu0 %171
  %173 = vrot.lane.b32.xlu0 %v74, 17
  %v174 = vpop.permute.xlu0 %173
  %175 = vrot.lane.b32.xlu0 %v75, 17
  %v176 = vpop.permute.xlu0 %175
  %vm177 = vcmask 138240
  %v178 = vsel %vm177, %v172, %v174
  %v179 = vsel %vm177, %v174, %v176
  %v183 = vsel %vm93, %v76, 0
  %185 = vmatprep.subr.mxu0 %v179
  %186 = vmatpush1.msra.mxu0 %v178
  %187 = vmatprep.subr.mxu0 0.0
  %188 = vmatpush1.msra.mxu0 0.0
  %189 = vmatprep.subr.mxu0 0.0
  %190 = vmatpush1.msra.mxu0 0.0
  %191 = vmatprep.subr.mxu0 0.0
  %192 = vmatpush1.msra.mxu0 0.0
  %193 = vmatprep.subr.mxu0 0.0
  %194 = vmatpush1.msra.mxu0 0.0
  %195 = vmatprep.subr.mxu0 0.0
  %196 = vmatpush1.msra.mxu0 0.0
  %197 = vmatprep.subr.mxu0 0.0
  %198 = vmatpush1.msra.mxu0 0.0
  %199 = vmatprep.subr.mxu0 0.0
  %200 = vmatpush1.msra.mxu0 0.0
  %201 = vmatprep.subr.mxu0 0.0
  %202 = vmatpush1.msra.mxu0 0.0
  %203 = vmatprep.subr.mxu0 0.0
  %204 = vmatpush1.msra.mxu0 0.0
  %205 = vmatprep.subr.mxu0 0.0
  %206 = vmatpush1.msra.mxu0 0.0
  %207 = vmatprep.subr.mxu0 0.0
  %208 = vmatpush1.msra.mxu0 0.0
  %209 = vmatprep.subr.mxu0 0.0
  %210 = vmatpush1.msra.mxu0 0.0
  %211 = vmatprep.subr.mxu0 0.0
  %212 = vmatpush1.msra.mxu0 0.0
  %213 = vmatprep.subr.mxu0 0.0
  %214 = vmatpush1.msra.mxu0 0.0
  %215 = vmatprep.subr.mxu0 0.0
  %216 = vmatpush1.msra.mxu0 0.0
  %217 = vmatprep.subr.mxu0 0.0
  %218 = vmatpush1.msra.mxu0 0.0
  %219 = vmatprep.subr.mxu0 0.0
  %220 = vmatpush1.msra.mxu0 0.0
  %221 = vmatprep.subr.mxu0 0.0
  %222 = vmatpush1.msra.mxu0 0.0
  %223 = vmatprep.subr.mxu0 0.0
  %224 = vmatpush1.msra.mxu0 0.0
  %225 = vmatprep.subr.mxu0 0.0
  %226 = vmatpush1.msra.mxu0 0.0
  %227 = vmatprep.subr.mxu0 0.0
  %228 = vmatpush1.msra.mxu0 0.0
  %229 = vmatprep.subr.mxu0 0.0
  %230 = vmatpush1.msra.mxu0 0.0
  %231 = vmatprep.subr.mxu0 0.0
  %232 = vmatpush1.msra.mxu0 0.0
  %233 = vmatprep.subr.mxu0 0.0
  %234 = vmatpush1.msra.mxu0 0.0
  %235 = vmatprep.subr.mxu0 0.0
  %236 = vmatpush1.msra.mxu0 0.0
  %237 = vmatprep.subr.mxu0 0.0
  %238 = vmatpush1.msra.mxu0 0.0
  %239 = vmatprep.subr.mxu0 0.0
  %240 = vmatpush1.msra.mxu0 0.0
  %241 = vmatprep.subr.mxu0 0.0
  %242 = vmatpush1.msra.mxu0 0.0
  %243 = vmatprep.subr.mxu0 0.0
  %244 = vmatpush1.msra.mxu0 0.0
  %245 = vmatprep.subr.mxu0 0.0
  %246 = vmatpush1.msra.mxu0 0.0
  %247 = vmatprep.subr.mxu0 0.0
  %248 = vmatpush1.msra.mxu0 0.0
  %249 = vmatprep.mubr.f32.mxu0 0.0
  %250 = vmatmul.mubr.f32.gmra.mrb[0].mxu0 %v183
  %v251 = vpop.f32.mrb[0].mxu0
  %v252 = vadd.f32 %v164, %v251
  %v253 = vpop.f32.mrb[0].mxu0
  %v254 = vadd.f32 %v166, %v253
  %255 = vdwg.mxu0
  %258 = vrot.lane.b32.xlu0 %v57, 113
  %v259 = vpop.permute.xlu0 %258
  %260 = vrot.lane.b32.xlu0 %v58, 113
  %v261 = vpop.permute.xlu0 %260
  %vm262 = vcmask 924672
  %v263 = vsel %vm262, %v259, %v261
  %v267 = vmul.f32 %v59, %v259
  %v268 = vmul.f32 %v60, %v263
  %v269 = vmul.f32 %v61, %v261
  %s270 = scalar_lea.vmem %s1, 16
  %v271 = vld [vmem:[%s270] sm:$0xff]
  %275 = vrot.lane.b32.xlu0 %v267, 15
  %v276 = vpop.permute.xlu0 %275
  %277 = vrot.lane.b32.xlu0 %v268, 15
  %v278 = vpop.permute.xlu0 %277
  %279 = vrot.lane.b32.xlu0 %v269, 15
  %v280 = vpop.permute.xlu0 %279
  %vm281 = vcmask 121856
  %v282 = vsel %vm281, %v276, %v278
  %v283 = vsel %vm281, %v278, %v280
  %v287 = vsel %vm93, %v271, 0
  %289 = vmatprep.subr.mxu0 %v283
  %290 = vmatpush1.msra.mxu0 %v282
  %291 = vmatprep.subr.mxu0 0.0
  %292 = vmatpush1.msra.mxu0 0.0
  %293 = vmatprep.subr.mxu0 0.0
  %294 = vmatpush1.msra.mxu0 0.0
  %295 = vmatprep.subr.mxu0 0.0
  %296 = vmatpush1.msra.mxu0 0.0
  %297 = vmatprep.subr.mxu0 0.0
  %298 = vmatpush1.msra.mxu0 0.0
  %299 = vmatprep.subr.mxu0 0.0
  %300 = vmatpush1.msra.mxu0 0.0
  %301 = vmatprep.subr.mxu0 0.0
  %302 = vmatpush1.msra.mxu0 0.0
  %303 = vmatprep.subr.mxu0 0.0
  %304 = vmatpush1.msra.mxu0 0.0
  %305 = vmatprep.subr.mxu0 0.0
  %306 = vmatpush1.msra.mxu0 0.0
  %307 = vmatprep.subr.mxu0 0.0
  %308 = vmatpush1.msra.mxu0 0.0
  %309 = vmatprep.subr.mxu0 0.0
  %310 = vmatpush1.msra.mxu0 0.0
  %311 = vmatprep.subr.mxu0 0.0
  %312 = vmatpush1.msra.mxu0 0.0
  %313 = vmatprep.subr.mxu0 0.0
  %314 = vmatpush1.msra.mxu0 0.0
  %315 = vmatprep.subr.mxu0 0.0
  %316 = vmatpush1.msra.mxu0 0.0
  %317 = vmatprep.subr.mxu0 0.0
  %318 = vmatpush1.msra.mxu0 0.0
  %319 = vmatprep.subr.mxu0 0.0
  %320 = vmatpush1.msra.mxu0 0.0
  %321 = vmatprep.subr.mxu0 0.0
  %322 = vmatpush1.msra.mxu0 0.0
  %323 = vmatprep.subr.mxu0 0.0
  %324 = vmatpush1.msra.mxu0 0.0
  %325 = vmatprep.subr.mxu0 0.0
  %326 = vmatpush1.msra.mxu0 0.0
  %327 = vmatprep.subr.mxu0 0.0
  %328 = vmatpush1.msra.mxu0 0.0
  %329 = vmatprep.subr.mxu0 0.0
  %330 = vmatpush1.msra.mxu0 0.0
  %331 = vmatprep.subr.mxu0 0.0
  %332 = vmatpush1.msra.mxu0 0.0
  %333 = vmatprep.subr.mxu0 0.0
  %334 = vmatpush1.msra.mxu0 0.0
  %335 = vmatprep.subr.mxu0 0.0
  %336 = vmatpush1.msra.mxu0 0.0
  %337 = vmatprep.subr.mxu0 0.0
  %338 = vmatpush1.msra.mxu0 0.0
  %339 = vmatprep.subr.mxu0 0.0
  %340 = vmatpush1.msra.mxu0 0.0
  %341 = vmatprep.subr.mxu0 0.0
  %342 = vmatpush1.msra.mxu0 0.0
  %343 = vmatprep.subr.mxu0 0.0
  %344 = vmatpush1.msra.mxu0 0.0
  %345 = vmatprep.subr.mxu0 0.0
  %346 = vmatpush1.msra.mxu0 0.0
  %347 = vmatprep.subr.mxu0 0.0
  %348 = vmatpush1.msra.mxu0 0.0
  %349 = vmatprep.subr.mxu0 0.0
  %350 = vmatpush1.msra.mxu0 0.0
  %351 = vmatprep.subr.mxu0 0.0
  %352 = vmatpush1.msra.mxu0 0.0
  %353 = vmatprep.mubr.f32.mxu0 0.0
  %354 = vmatmul.mubr.f32.gmra.mrb[0].mxu0 %v287
  %v355 = vpop.f32.mrb[0].mxu0
  %v356 = vadd.f32 0.0, %v355
  %v357 = vpop.f32.mrb[0].mxu0
  %v358 = vadd.f32 0.0, %v357
  %359 = vdwg.mxu0
  %v360 = vadd.f32 %v252, %v356
  %v361 = vadd.f32 %v254, %v358
  %362 = vrot.lane.b32.xlu0 %v51, 127
  %v363 = vpop.permute.xlu0 %362
  %364 = vrot.lane.b32.xlu0 %v52, 127
  %v365 = vpop.permute.xlu0 %364
  %vm366 = vcmask 1039360
  %v367 = vsel %vm366, %v363, %v365
  %v371 = vmul.f32 %v59, %v363
  %v372 = vmul.f32 %v60, %v367
  %v373 = vmul.f32 %v61, %v365
  %s374 = scalar_lea.vmem %s1, 24
  %v375 = vld [vmem:[%s374] sm:$0xff]
  %379 = vrot.lane.b32.xlu0 %v371, 1
  %v380 = vpop.permute.xlu0 %379
  %381 = vrot.lane.b32.xlu0 %v372, 1
  %v382 = vpop.permute.xlu0 %381
  %383 = vrot.lane.b32.xlu0 %v373, 1
  %v384 = vpop.permute.xlu0 %383
  %vm385 = vcmask 7168
  %v386 = vsel %vm385, %v380, %v382
  %v387 = vsel %vm385, %v382, %v384
  %v391 = vsel %vm93, %v375, 0
  %393 = vmatprep.subr.mxu0 %v387
  %394 = vmatpush1.msra.mxu0 %v386
  %395 = vmatprep.subr.mxu0 0.0
  %396 = vmatpush1.msra.mxu0 0.0
  %397 = vmatprep.subr.mxu0 0.0
  %398 = vmatpush1.msra.mxu0 0.0
  %399 = vmatprep.subr.mxu0 0.0
  %400 = vmatpush1.msra.mxu0 0.0
  %401 = vmatprep.subr.mxu0 0.0
  %402 = vmatpush1.msra.mxu0 0.0
  %403 = vmatprep.subr.mxu0 0.0
  %404 = vmatpush1.msra.mxu0 0.0
  %405 = vmatprep.subr.mxu0 0.0
  %406 = vmatpush1.msra.mxu0 0.0
  %407 = vmatprep.subr.mxu0 0.0
  %408 = vmatpush1.msra.mxu0 0.0
  %409 = vmatprep.subr.mxu0 0.0
  %410 = vmatpush1.msra.mxu0 0.0
  %411 = vmatprep.subr.mxu0 0.0
  %412 = vmatpush1.msra.mxu0 0.0
  %413 = vmatprep.subr.mxu0 0.0
  %414 = vmatpush1.msra.mxu0 0.0
  %415 = vmatprep.subr.mxu0 0.0
  %416 = vmatpush1.msra.mxu0 0.0
  %417 = vmatprep.subr.mxu0 0.0
  %418 = vmatpush1.msra.mxu0 0.0
  %419 = vmatprep.subr.mxu0 0.0
  %420 = vmatpush1.msra.mxu0 0.0
  %421 = vmatprep.subr.mxu0 0.0
  %422 = vmatpush1.msra.mxu0 0.0
  %423 = vmatprep.subr.mxu0 0.0
  %424 = vmatpush1.msra.mxu0 0.0
  %425 = vmatprep.subr.mxu0 0.0
  %426 = vmatpush1.msra.mxu0 0.0
  %427 = vmatprep.subr.mxu0 0.0
  %428 = vmatpush1.msra.mxu0 0.0
  %429 = vmatprep.subr.mxu0 0.0
  %430 = vmatpush1.msra.mxu0 0.0
  %431 = vmatprep.subr.mxu0 0.0
  %432 = vmatpush1.msra.mxu0 0.0
  %433 = vmatprep.subr.mxu0 0.0
  %434 = vmatpush1.msra.mxu0 0.0
  %435 = vmatprep.subr.mxu0 0.0
  %436 = vmatpush1.msra.mxu0 0.0
  %437 = vmatprep.subr.mxu0 0.0
  %438 = vmatpush1.msra.mxu0 0.0
  %439 = vmatprep.subr.mxu0 0.0
  %440 = vmatpush1.msra.mxu0 0.0
  %441 = vmatprep.subr.mxu0 0.0
  %442 = vmatpush1.msra.mxu0 0.0
  %443 = vmatprep.subr.mxu0 0.0
  %444 = vmatpush1.msra.mxu0 0.0
  %445 = vmatprep.subr.mxu0 0.0
  %446 = vmatpush1.msra.mxu0 0.0
  %447 = vmatprep.subr.mxu0 0.0
  %448 = vmatpush1.msra.mxu0 0.0
  %449 = vmatprep.subr.mxu0 0.0
  %450 = vmatpush1.msra.mxu0 0.0
  %451 = vmatprep.subr.mxu0 0.0
  %452 = vmatpush1.msra.mxu0 0.0
  %453 = vmatprep.subr.mxu0 0.0
  %454 = vmatpush1.msra.mxu0 0.0
  %455 = vmatprep.subr.mxu0 0.0
  %456 = vmatpush1.msra.mxu0 0.0
  %457 = vmatprep.mubr.f32.mxu0 0.0
  %458 = vmatmul.mubr.f32.gmra.mrb[0].mxu0 %v391
  %v459 = vpop.f32.mrb[0].mxu0
  %v460 = vadd.f32 0.0, %v459
  %v461 = vpop.f32.mrb[0].mxu0
  %v462 = vadd.f32 0.0, %v461
  %463 = vdwg.mxu0
  %v464 = vadd.f32 %v360, %v460
  %v465 = vadd.f32 %v361, %v462
  %s466 = scalar_lea.vmem %s1, 32
  %v467 = vld [vmem:[%s466] sm:$0xff]
  %v469 = vsel %vm93, %v467, 0
  %471 = vmatprep.subr.mxu0 %v61
  %472 = vmatpush1.msra.mxu0 %v60
  %473 = vmatprep.subr.mxu0 0.0
  %474 = vmatpush1.msra.mxu0 0.0
  %475 = vmatprep.subr.mxu0 0.0
  %476 = vmatpush1.msra.mxu0 0.0
  %477 = vmatprep.subr.mxu0 0.0
  %478 = vmatpush1.msra.mxu0 0.0
  %479 = vmatprep.subr.mxu0 0.0
  %480 = vmatpush1.msra.mxu0 0.0
  %481 = vmatprep.subr.mxu0 0.0
  %482 = vmatpush1.msra.mxu0 0.0
  %483 = vmatprep.subr.mxu0 0.0
  %484 = vmatpush1.msra.mxu0 0.0
  %485 = vmatprep.subr.mxu0 0.0
  %486 = vmatpush1.msra.mxu0 0.0
  %487 = vmatprep.subr.mxu0 0.0
  %488 = vmatpush1.msra.mxu0 0.0
  %489 = vmatprep.subr.mxu0 0.0
  %490 = vmatpush1.msra.mxu0 0.0
  %491 = vmatprep.subr.mxu0 0.0
  %492 = vmatpush1.msra.mxu0 0.0
  %493 = vmatprep.subr.mxu0 0.0
  %494 = vmatpush1.msra.mxu0 0.0
  %495 = vmatprep.subr.mxu0 0.0
  %496 = vmatpush1.msra.mxu0 0.0
  %497 = vmatprep.subr.mxu0 0.0
  %498 = vmatpush1.msra.mxu0 0.0
  %499 = vmatprep.subr.mxu0 0.0
  %500 = vmatpush1.msra.mxu0 0.0
  %501 = vmatprep.subr.mxu0 0.0
  %502 = vmatpush1.msra.mxu0 0.0
  %503 = vmatprep.subr.mxu0 0.0
  %504 = vmatpush1.msra.mxu0 0.0
  %505 = vmatprep.subr.mxu0 0.0
  %506 = vmatpush1.msra.mxu0 0.0
  %507 = vmatprep.subr.mxu0 0.0
  %508 = vmatpush1.msra.mxu0 0.0
  %509 = vmatprep.subr.mxu0 0.0
  %510 = vmatpush1.msra.mxu0 0.0
  %511 = vmatprep.subr.mxu0 0.0
  %512 = vmatpush1.msra.mxu0 0.0
  %513 = vmatprep.subr.mxu0 0.0
  %514 = vmatpush1.msra.mxu0 0.0
  %515 = vmatprep.subr.mxu0 0.0
  %516 = vmatpush1.msra.mxu0 0.0
  %517 = vmatprep.subr.mxu0 0.0
  %518 = vmatpush1.msra.mxu0 0.0
  %519 = vmatprep.subr.mxu0 0.0
  %520 = vmatpush1.msra.mxu0 0.0
  %521 = vmatprep.subr.mxu0 0.0
  %522 = vmatpush1.msra.mxu0 0.0
  %523 = vmatprep.subr.mxu0 0.0
  %524 = vmatpush1.msra.mxu0 0.0
  %525 = vmatprep.subr.mxu0 0.0
  %526 = vmatpush1.msra.mxu0 0.0
  %527 = vmatprep.subr.mxu0 0.0
  %528 = vmatpush1.msra.mxu0 0.0
  %529 = vmatprep.subr.mxu0 0.0
  %530 = vmatpush1.msra.mxu0 0.0
  %531 = vmatprep.subr.mxu0 0.0
  %532 = vmatpush1.msra.mxu0 0.0
  %533 = vmatprep.subr.mxu0 0.0
  %534 = vmatpush1.msra.mxu0 0.0
  %535 = vmatprep.mubr.f32.mxu0 0.0
  %536 = vmatmul.mubr.f32.gmra.mrb[0].mxu0 %v469
  %v537 = vpop.f32.mrb[0].mxu0
  %v538 = vadd.f32 0.0, %v537
  %v539 = vpop.f32.mrb[0].mxu0
  %v540 = vadd.f32 0.0, %v539
  %541 = vdwg.mxu0
  %v542 = vadd.f32 %v464, %v538
  %v543 = vadd.f32 %v465, %v540
  %v544 = vld [vmem:[#allocation2 + $0x8] sm:$0xff]
  %v545 = vld [vmem:[#allocation2 + $0x10] sm:$0xff]
  %v546 = vld [vmem:[#allocation2 + $0x18] sm:$0xff]
  %547 = vrot.lane.b32.xlu0 %v57, 1
  %v548 = vpop.permute.xlu0 %547
  %549 = vrot.lane.b32.xlu0 %v58, 1
  %v550 = vpop.permute.xlu0 %549
  %v551 = vsel %vm385, %v548, %v550
  %v555 = vmul.f32 %v544, %v548
  %v556 = vmul.f32 %v545, %v551
  %v557 = vmul.f32 %v546, %v550
  %s558 = scalar_lea.vmem %s1, 40
  %v559 = vld [vmem:[%s558] sm:$0xff]
  %563 = vrot.lane.b32.xlu0 %v555, 127
  %v564 = vpop.permute.xlu0 %563
  %565 = vrot.lane.b32.xlu0 %v556, 127
  %v566 = vpop.permute.xlu0 %565
  %567 = vrot.lane.b32.xlu0 %v557, 127
  %v568 = vpop.permute.xlu0 %567
  %v569 = vsel %vm366, %v564, %v566
  %v570 = vsel %vm366, %v566, %v568
  %v574 = vsel %vm93, %v559, 0
  %576 = vmatprep.subr.mxu0 %v570
  %577 = vmatpush1.msra.mxu0 %v569
  %578 = vmatprep.subr.mxu0 0.0
  %579 = vmatpush1.msra.mxu0 0.0
  %580 = vmatprep.subr.mxu0 0.0
  %581 = vmatpush1.msra.mxu0 0.0
  %582 = vmatprep.subr.mxu0 0.0
  %583 = vmatpush1.msra.mxu0 0.0
  %584 = vmatprep.subr.mxu0 0.0
  %585 = vmatpush1.msra.mxu0 0.0
  %586 = vmatprep.subr.mxu0 0.0
  %587 = vmatpush1.msra.mxu0 0.0
  %588 = vmatprep.subr.mxu0 0.0
  %589 = vmatpush1.msra.mxu0 0.0
  %590 = vmatprep.subr.mxu0 0.0
  %591 = vmatpush1.msra.mxu0 0.0
  %592 = vmatprep.subr.mxu0 0.0
  %593 = vmatpush1.msra.mxu0 0.0
  %594 = vmatprep.subr.mxu0 0.0
  %595 = vmatpush1.msra.mxu0 0.0
  %596 = vmatprep.subr.mxu0 0.0
  %597 = vmatpush1.msra.mxu0 0.0
  %598 = vmatprep.subr.mxu0 0.0
  %599 = vmatpush1.msra.mxu0 0.0
  %600 = vmatprep.subr.mxu0 0.0
  %601 = vmatpush1.msra.mxu0 0.0
  %602 = vmatprep.subr.mxu0 0.0
  %603 = vmatpush1.msra.mxu0 0.0
  %604 = vmatprep.subr.mxu0 0.0
  %605 = vmatpush1.msra.mxu0 0.0
  %606 = vmatprep.subr.mxu0 0.0
  %607 = vmatpush1.msra.mxu0 0.0
  %608 = vmatprep.subr.mxu0 0.0
  %609 = vmatpush1.msra.mxu0 0.0
  %610 = vmatprep.subr.mxu0 0.0
  %611 = vmatpush1.msra.mxu0 0.0
  %612 = vmatprep.subr.mxu0 0.0
  %613 = vmatpush1.msra.mxu0 0.0
  %614 = vmatprep.subr.mxu0 0.0
  %615 = vmatpush1.msra.mxu0 0.0
  %616 = vmatprep.subr.mxu0 0.0
  %617 = vmatpush1.msra.mxu0 0.0
  %618 = vmatprep.subr.mxu0 0.0
  %619 = vmatpush1.msra.mxu0 0.0
  %620 = vmatprep.subr.mxu0 0.0
  %621 = vmatpush1.msra.mxu0 0.0
  %622 = vmatprep.subr.mxu0 0.0
  %623 = vmatpush1.msra.mxu0 0.0
  %624 = vmatprep.subr.mxu0 0.0
  %625 = vmatpush1.msra.mxu0 0.0
  %626 = vmatprep.subr.mxu0 0.0
  %627 = vmatpush1.msra.mxu0 0.0
  %628 = vmatprep.subr.mxu0 0.0
  %629 = vmatpush1.msra.mxu0 0.0
  %630 = vmatprep.subr.mxu0 0.0
  %631 = vmatpush1.msra.mxu0 0.0
  %632 = vmatprep.subr.mxu0 0.0
  %633 = vmatpush1.msra.mxu0 0.0
  %634 = vmatprep.subr.mxu0 0.0
  %635 = vmatpush1.msra.mxu0 0.0
  %636 = vmatprep.subr.mxu0 0.0
  %637 = vmatpush1.msra.mxu0 0.0
  %638 = vmatprep.subr.mxu0 0.0
  %639 = vmatpush1.msra.mxu0 0.0
  %640 = vmatprep.mubr.f32.mxu0 0.0
  %641 = vmatmul.mubr.f32.gmra.mrb[0].mxu0 %v574
  %v642 = vpop.f32.mrb[0].mxu0
  %v643 = vadd.f32 0.0, %v642
  %v644 = vpop.f32.mrb[0].mxu0
  %v645 = vadd.f32 0.0, %v644
  %646 = vdwg.mxu0
  %v647 = vadd.f32 %v542, %v643
  %v648 = vadd.f32 %v543, %v645
  %649 = vrot.lane.b32.xlu0 %v51, 15
  %v650 = vpop.permute.xlu0 %649
  %651 = vrot.lane.b32.xlu0 %v52, 15
  %v652 = vpop.permute.xlu0 %651
  %v653 = vsel %vm281, %v650, %v652
  %v657 = vmul.f32 %v544, %v650
  %v658 = vmul.f32 %v545, %v653
  %v659 = vmul.f32 %v546, %v652
  %s660 = scalar_lea.vmem %s1, 48
  %v661 = vld [vmem:[%s660] sm:$0xff]
  %665 = vrot.lane.b32.xlu0 %v657, 113
  %v666 = vpop.permute.xlu0 %665
  %667 = vrot.lane.b32.xlu0 %v658, 113
  %v668 = vpop.permute.xlu0 %667
  %669 = vrot.lane.b32.xlu0 %v659, 113
  %v670 = vpop.permute.xlu0 %669
  %v671 = vsel %vm262, %v666, %v668
  %v672 = vsel %vm262, %v668, %v670
  %v676 = vsel %vm93, %v661, 0
  %678 = vmatprep.subr.mxu0 %v672
  %679 = vmatpush1.msra.mxu0 %v671
  %680 = vmatprep.subr.mxu0 0.0
  %681 = vmatpush1.msra.mxu0 0.0
  %682 = vmatprep.subr.mxu0 0.0
  %683 = vmatpush1.msra.mxu0 0.0
  %684 = vmatprep.subr.mxu0 0.0
  %685 = vmatpush1.msra.mxu0 0.0
  %686 = vmatprep.subr.mxu0 0.0
  %687 = vmatpush1.msra.mxu0 0.0
  %688 = vmatprep.subr.mxu0 0.0
  %689 = vmatpush1.msra.mxu0 0.0
  %690 = vmatprep.subr.mxu0 0.0
  %691 = vmatpush1.msra.mxu0 0.0
  %692 = vmatprep.subr.mxu0 0.0
  %693 = vmatpush1.msra.mxu0 0.0
  %694 = vmatprep.subr.mxu0 0.0
  %695 = vmatpush1.msra.mxu0 0.0
  %696 = vmatprep.subr.mxu0 0.0
  %697 = vmatpush1.msra.mxu0 0.0
  %698 = vmatprep.subr.mxu0 0.0
  %699 = vmatpush1.msra.mxu0 0.0
  %700 = vmatprep.subr.mxu0 0.0
  %701 = vmatpush1.msra.mxu0 0.0
  %702 = vmatprep.subr.mxu0 0.0
  %703 = vmatpush1.msra.mxu0 0.0
  %704 = vmatprep.subr.mxu0 0.0
  %705 = vmatpush1.msra.mxu0 0.0
  %706 = vmatprep.subr.mxu0 0.0
  %707 = vmatpush1.msra.mxu0 0.0
  %708 = vmatprep.subr.mxu0 0.0
  %709 = vmatpush1.msra.mxu0 0.0
  %710 = vmatprep.subr.mxu0 0.0
  %711 = vmatpush1.msra.mxu0 0.0
  %712 = vmatprep.subr.mxu0 0.0
  %713 = vmatpush1.msra.mxu0 0.0
  %714 = vmatprep.subr.mxu0 0.0
  %715 = vmatpush1.msra.mxu0 0.0
  %716 = vmatprep.subr.mxu0 0.0
  %717 = vmatpush1.msra.mxu0 0.0
  %718 = vmatprep.subr.mxu0 0.0
  %719 = vmatpush1.msra.mxu0 0.0
  %720 = vmatprep.subr.mxu0 0.0
  %721 = vmatpush1.msra.mxu0 0.0
  %722 = vmatprep.subr.mxu0 0.0
  %723 = vmatpush1.msra.mxu0 0.0
  %724 = vmatprep.subr.mxu0 0.0
  %725 = vmatpush1.msra.mxu0 0.0
  %726 = vmatprep.subr.mxu0 0.0
  %727 = vmatpush1.msra.mxu0 0.0
  %728 = vmatprep.subr.mxu0 0.0
  %729 = vmatpush1.msra.mxu0 0.0
  %730 = vmatprep.subr.mxu0 0.0
  %731 = vmatpush1.msra.mxu0 0.0
  %732 = vmatprep.subr.mxu0 0.0
  %733 = vmatpush1.msra.mxu0 0.0
  %734 = vmatprep.subr.mxu0 0.0
  %735 = vmatpush1.msra.mxu0 0.0
  %736 = vmatprep.subr.mxu0 0.0
  %737 = vmatpush1.msra.mxu0 0.0
  %738 = vmatprep.subr.mxu0 0.0
  %739 = vmatpush1.msra.mxu0 0.0
  %740 = vmatprep.subr.mxu0 0.0
  %741 = vmatpush1.msra.mxu0 0.0
  %742 = vmatprep.mubr.f32.mxu0 0.0
  %743 = vmatmul.mubr.f32.gmra.mrb[0].mxu0 %v676
  %v744 = vpop.f32.mrb[0].mxu0
  %v745 = vadd.f32 0.0, %v744
  %v746 = vpop.f32.mrb[0].mxu0
  %v747 = vadd.f32 0.0, %v746
  %748 = vdwg.mxu0
  %v749 = vadd.f32 %v647, %v745
  %v750 = vadd.f32 %v648, %v747
  %s751 = scalar_lea.vmem %s1, 56
  %v752 = vld [vmem:[%s751] sm:$0xff]
  %756 = vrot.lane.b32.xlu0 %v544, 112
  %v757 = vpop.permute.xlu0 %756
  %758 = vrot.lane.b32.xlu0 %v545, 112
  %v759 = vpop.permute.xlu0 %758
  %760 = vrot.lane.b32.xlu0 %v546, 112
  %v761 = vpop.permute.xlu0 %760
  %vm762 = vcmask 916480
  %v763 = vsel %vm762, %v757, %v759
  %v764 = vsel %vm762, %v759, %v761
  %v768 = vsel %vm93, %v752, 0
  %770 = vmatprep.subr.mxu0 %v764
  %771 = vmatpush1.msra.mxu0 %v763
  %772 = vmatprep.subr.mxu0 0.0
  %773 = vmatpush1.msra.mxu0 0.0
  %774 = vmatprep.subr.mxu0 0.0
  %775 = vmatpush1.msra.mxu0 0.0
  %776 = vmatprep.subr.mxu0 0.0
  %777 = vmatpush1.msra.mxu0 0.0
  %778 = vmatprep.subr.mxu0 0.0
  %779 = vmatpush1.msra.mxu0 0.0
  %780 = vmatprep.subr.mxu0 0.0
  %781 = vmatpush1.msra.mxu0 0.0
  %782 = vmatprep.subr.mxu0 0.0
  %783 = vmatpush1.msra.mxu0 0.0
  %784 = vmatprep.subr.mxu0 0.0
  %785 = vmatpush1.msra.mxu0 0.0
  %786 = vmatprep.subr.mxu0 0.0
  %787 = vmatpush1.msra.mxu0 0.0
  %788 = vmatprep.subr.mxu0 0.0
  %789 = vmatpush1.msra.mxu0 0.0
  %790 = vmatprep.subr.mxu0 0.0
  %791 = vmatpush1.msra.mxu0 0.0
  %792 = vmatprep.subr.mxu0 0.0
  %793 = vmatpush1.msra.mxu0 0.0
  %794 = vmatprep.subr.mxu0 0.0
  %795 = vmatpush1.msra.mxu0 0.0
  %796 = vmatprep.subr.mxu0 0.0
  %797 = vmatpush1.msra.mxu0 0.0
  %798 = vmatprep.subr.mxu0 0.0
  %799 = vmatpush1.msra.mxu0 0.0
  %800 = vmatprep.subr.mxu0 0.0
  %801 = vmatpush1.msra.mxu0 0.0
  %802 = vmatprep.subr.mxu0 0.0
  %803 = vmatpush1.msra.mxu0 0.0
  %804 = vmatprep.subr.mxu0 0.0
  %805 = vmatpush1.msra.mxu0 0.0
  %806 = vmatprep.subr.mxu0 0.0
  %807 = vmatpush1.msra.mxu0 0.0
  %808 = vmatprep.subr.mxu0 0.0
  %809 = vmatpush1.msra.mxu0 0.0
  %810 = vmatprep.subr.mxu0 0.0
  %811 = vmatpush1.msra.mxu0 0.0
  %812 = vmatprep.subr.mxu0 0.0
  %813 = vmatpush1.msra.mxu0 0.0
  %814 = vmatprep.subr.mxu0 0.0
  %815 = vmatpush1.msra.mxu0 0.0
  %816 = vmatprep.subr.mxu0 0.0
  %817 = vmatpush1.msra.mxu0 0.0
  %818 = vmatprep.subr.mxu0 0.0
  %819 = vmatpush1.msra.mxu0 0.0
  %820 = vmatprep.subr.mxu0 0.0
  %821 = vmatpush1.msra.mxu0 0.0
  %822 = vmatprep.subr.mxu0 0.0
  %823 = vmatpush1.msra.mxu0 0.0
  %824 = vmatprep.subr.mxu0 0.0
  %825 = vmatpush1.msra.mxu0 0.0
  %826 = vmatprep.subr.mxu0 0.0
  %827 = vmatpush1.msra.mxu0 0.0
  %828 = vmatprep.subr.mxu0 0.0
  %829 = vmatpush1.msra.mxu0 0.0
  %830 = vmatprep.subr.mxu0 0.0
  %831 = vmatpush1.msra.mxu0 0.0
  %832 = vmatprep.subr.mxu0 0.0
  %833 = vmatpush1.msra.mxu0 0.0
  %834 = vmatprep.mubr.f32.mxu0 0.0
  %835 = vmatmul.mubr.f32.gmra.mrb[0].mxu0 %v768
  %v836 = vpop.f32.mrb[0].mxu0
  %v837 = vadd.f32 0.0, %v836
  %v838 = vpop.f32.mrb[0].mxu0
  %v839 = vadd.f32 0.0, %v838
  %840 = vdwg.mxu0
  %v841 = vadd.f32 %v749, %v837
  %v842 = vadd.f32 %v750, %v839
  %843 = vrot.lane.b32.xlu0 %v57, 17
  %v844 = vpop.permute.xlu0 %843
  %845 = vrot.lane.b32.xlu0 %v58, 17
  %v846 = vpop.permute.xlu0 %845
  %v847 = vsel %vm177, %v844, %v846
  %v851 = vmul.f32 %v544, %v844
  %v852 = vmul.f32 %v545, %v847
  %v853 = vmul.f32 %v546, %v846
  %s854 = scalar_lea.vmem %s1, 64
  %v855 = vld [vmem:[%s854] sm:$0xff]
  %859 = vrot.lane.b32.xlu0 %v851, 111
  %v860 = vpop.permute.xlu0 %859
  %861 = vrot.lane.b32.xlu0 %v852, 111
  %v862 = vpop.permute.xlu0 %861
  %863 = vrot.lane.b32.xlu0 %v853, 111
  %v864 = vpop.permute.xlu0 %863
  %v865 = vsel %vm68, %v860, %v862
  %v866 = vsel %vm68, %v862, %v864
  %v870 = vsel %vm93, %v855, 0
  %872 = vmatprep.subr.mxu0 %v866
  %873 = vmatpush1.msra.mxu0 %v865
  %874 = vmatprep.subr.mxu0 0.0
  %875 = vmatpush1.msra.mxu0 0.0
  %876 = vmatprep.subr.mxu0 0.0
  %877 = vmatpush1.msra.mxu0 0.0
  %878 = vmatprep.subr.mxu0 0.0
  %879 = vmatpush1.msra.mxu0 0.0
  %880 = vmatprep.subr.mxu0 0.0
  %881 = vmatpush1.msra.mxu0 0.0
  %882 = vmatprep.subr.mxu0 0.0
  %883 = vmatpush1.msra.mxu0 0.0
  %884 = vmatprep.subr.mxu0 0.0
  %885 = vmatpush1.msra.mxu0 0.0
  %886 = vmatprep.subr.mxu0 0.0
  %887 = vmatpush1.msra.mxu0 0.0
  %888 = vmatprep.subr.mxu0 0.0
  %889 = vmatpush1.msra.mxu0 0.0
  %890 = vmatprep.subr.mxu0 0.0
  %891 = vmatpush1.msra.mxu0 0.0
  %892 = vmatprep.subr.mxu0 0.0
  %893 = vmatpush1.msra.mxu0 0.0
  %894 = vmatprep.subr.mxu0 0.0
  %895 = vmatpush1.msra.mxu0 0.0
  %896 = vmatprep.subr.mxu0 0.0
  %897 = vmatpush1.msra.mxu0 0.0
  %898 = vmatprep.subr.mxu0 0.0
  %899 = vmatpush1.msra.mxu0 0.0
  %900 = vmatprep.subr.mxu0 0.0
  %901 = vmatpush1.msra.mxu0 0.0
  %902 = vmatprep.subr.mxu0 0.0
  %903 = vmatpush1.msra.mxu0 0.0
  %904 = vmatprep.subr.mxu0 0.0
  %905 = vmatpush1.msra.mxu0 0.0
  %906 = vmatprep.subr.mxu0 0.0
  %907 = vmatpush1.msra.mxu0 0.0
  %908 = vmatprep.subr.mxu0 0.0
  %909 = vmatpush1.msra.mxu0 0.0
  %910 = vmatprep.subr.mxu0 0.0
  %911 = vmatpush1.msra.mxu0 0.0
  %912 = vmatprep.subr.mxu0 0.0
  %913 = vmatpush1.msra.mxu0 0.0
  %914 = vmatprep.subr.mxu0 0.0
  %915 = vmatpush1.msra.mxu0 0.0
  %916 = vmatprep.subr.mxu0 0.0
  %917 = vmatpush1.msra.mxu0 0.0
  %918 = vmatprep.subr.mxu0 0.0
  %919 = vmatpush1.msra.mxu0 0.0
  %920 = vmatprep.subr.mxu0 0.0
  %921 = vmatpush1.msra.mxu0 0.0
  %922 = vmatprep.subr.mxu0 0.0
  %923 = vmatpush1.msra.mxu0 0.0
  %924 = vmatprep.subr.mxu0 0.0
  %925 = vmatpush1.msra.mxu0 0.0
  %926 = vmatprep.subr.mxu0 0.0
  %927 = vmatpush1.msra.mxu0 0.0
  %928 = vmatprep.subr.mxu0 0.0
  %929 = vmatpush1.msra.mxu0 0.0
  %930 = vmatprep.subr.mxu0 0.0
  %931 = vmatpush1.msra.mxu0 0.0
  %932 = vmatprep.subr.mxu0 0.0
  %933 = vmatpush1.msra.mxu0 0.0
  %934 = vmatprep.subr.mxu0 0.0
  %935 = vmatpush1.msra.mxu0 0.0
  %936 = vmatprep.mubr.f32.mxu0 0.0
  %937 = vmatmul.mubr.f32.gmra.mrb[0].mxu0 %v870
  %v938 = vpop.f32.mrb[0].mxu0
  %v939 = vadd.f32 0.0, %v938
  %v940 = vpop.f32.mrb[0].mxu0
  %v941 = vadd.f32 0.0, %v940
  %942 = vdwg.mxu0
  %v943 = vadd.f32 %v841, %v939
  %v944 = vadd.f32 %v842, %v941
  %v945 = vld [vmem:[%s2] sm:$0xff]
  %947 = vset.pattern.permute.xlu0 0
  %948 = vperm.xlu0 %947, %v945
  %v949 = vpop.permute.xlu0 %948
  %v951 = vadd.f32 %v943, %v949
  %v952 = vadd.f32 %v944, %v949
  %v953 = vxor.u32 %v951, 2147483648
  %v954 = vxor.u32 %v952, 2147483648
  %v955 = vmul.f32 %v953, 1.442695
  %v956 = vpow.pop %v955
  %v957 = vmul.f32 %v954, 1.442695
  %v958 = vpow.pop %v957
  %v959 = vadd.f32 %v956, 1.0
  %v960 = vadd.f32 %v958, 1.0
  %v961 = vrcp.pop %v959
  %v962 = vmul.f32 1.0, %v961
  %v963 = vrcp.pop %v960
  %v964 = vmul.f32 1.0, %v963
  %v965 = vmul.f32 %v951, %v962
  %v966 = vmul.f32 %v952, %v964
  %967 = vst [vmem:[%s3] sm:$0xff] %v965
  %968 = vst [vmem:[%s3 + $0x8] sm:$0xff] %v966
  // Predicated region
  $region14: #{conv2d_silu.1} parent=0 // pred_check
    _
  $region15: #{conv2d_silu.1} parent=0 // pred_check_branch
    %970 = sbr.rel (0) target = $region17
  $region16: #{conv2d_silu.1} parent=0 // pred_region
    _
  $region17: #{conv2d_silu.1} parent=0 // pred_fallthru
    _
  // Predicated region
  $region18: #{conv2d_silu.1} parent=0 // pred_check
    _
  $region19: #{conv2d_silu.1} parent=0 // pred_check_branch
    %972 = sbr.rel (0) target = $region21
  $region20: #{conv2d_silu.1} parent=0 // pred_region
    _
  $region21: #{conv2d_silu.1} parent=0 // pred_fallthru
    _

</llo_original>
